<compile_context>
chip_gen: v5e
topology: v5e:2x2
jax: 0.10.0
libtpu: 0.0.40
codegen_flags: <defaults>
</compile_context>

<pallas_src>
import functools

import jax
import jax.numpy as jnp
from jax.experimental import pallas as pl
from jax.experimental.pallas import tpu as pltpu


def _round_up(x, m):
    return ((x + m - 1) // m) * m


# --------------------------------------------------------------------------- #
# Pass 1: H0 = (relu(X @ W1 + b1)) @ W2 + b2     (dropout = identity in eval)
# --------------------------------------------------------------------------- #
def mlp_kernel(x_ref, w1_ref, b1_ref, w2_ref, b2_ref, h0_ref):
    h = jnp.dot(x_ref[...], w1_ref[...], preferred_element_type=jnp.float32)
    h = jnp.maximum(h + b1_ref[...], 0.0)
    z = jnp.dot(h.astype(jnp.bfloat16), w2_ref[...],
                preferred_element_type=jnp.float32)
    h0_ref[...] = z + b2_ref[...]


# --------------------------------------------------------------------------- #
# Pass 2..K+1: Z_new = (1 - alpha) * A @ Z + alpha * H0
# grid = (row_tiles, k_tiles); output resident across k with f32 accumulator.
# --------------------------------------------------------------------------- #
def prop_kernel(a_ref, z_ref, h0_ref, out_ref, acc_ref, *,
                alpha, num_classes, apply_log_softmax):
    k = pl.program_id(1)

    @pl.when(k == 0)
    def _init():
        acc_ref[...] = jnp.zeros_like(acc_ref)

    acc_ref[...] += jnp.dot(a_ref[...], z_ref[...].astype(jnp.bfloat16),
                            preferred_element_type=jnp.float32)

    @pl.when(k == pl.num_programs(1) - 1)
    def _finalize():
        z = (1.0 - alpha) * acc_ref[...] + alpha * h0_ref[...]
        if apply_log_softmax:
            # log_softmax over the real classes only (pad columns masked out).
            col = jax.lax.broadcasted_iota(jnp.int32, z.shape, 1)
            zm = jnp.where(col < num_classes, z, -jnp.inf)
            m = jnp.max(zm, axis=1, keepdims=True)
            s = jnp.sum(jnp.exp(zm - m), axis=1, keepdims=True)
            z = zm - m - jnp.log(s)
        out_ref[...] = z


# --------------------------------------------------------------------------- #
# Wrapper
# --------------------------------------------------------------------------- #
def appnp_net_forward(x, a_norm, w1, b1, w2, b2, *, K, alpha, tile=256):
    """APPNP_Net forward.  x:(N,F), a_norm:(N,N), w1:(F,H), b1:(H,), w2:(H,C), b2:(C,)."""
    N, F = x.shape
    hidden = w1.shape[1]
    C = w2.shape[1]

    # tile=256 matches the native 256x256 MXU on v6e/v7x and is a 128-multiple
    # (v5e-friendly); ~1.5 MiB of VMEM per step, well under the 32 MiB scoped limit.
    tm = tk = tile
    N_pad = _round_up(max(N, tile), tile)
    F_pad = _round_up(F, 128)
    H_pad = _round_up(hidden, 128)
    C_pad = _round_up(C, 128)

    # Zero-padded, lane-dense operands; bf16 for MXU inputs, f32 for biases/state.
    x_p = jnp.zeros((N_pad, F_pad), jnp.bfloat16).at[:N, :F].set(x.astype(jnp.bfloat16))
    a_p = jnp.zeros((N_pad, N_pad), jnp.bfloat16).at[:N, :N].set(a_norm.astype(jnp.bfloat16))
    w1_p = jnp.zeros((F_pad, H_pad), jnp.bfloat16).at[:F, :hidden].set(w1.astype(jnp.bfloat16))
    b1_p = jnp.zeros((1, H_pad), jnp.float32).at[:, :hidden].set(b1.reshape(1, hidden))
    w2_p = jnp.zeros((H_pad, C_pad), jnp.bfloat16).at[:hidden, :C].set(w2.astype(jnp.bfloat16))
    b2_p = jnp.zeros((1, C_pad), jnp.float32).at[:, :C].set(b2.reshape(1, C))

    n_row = N_pad // tm
    n_k = N_pad // tk
    vmem_limit = 32 * 1024 * 1024

    # ---------------- pass 1: MLP, tiled over node rows ---------------- #
    h0 = pl.pallas_call(
        mlp_kernel,
        out_shape=jax.ShapeDtypeStruct((N_pad, C_pad), jnp.float32),
        grid_spec=pltpu.PrefetchScalarGridSpec(
            num_scalar_prefetch=0,
            grid=(n_row,),
            in_specs=[
                pl.BlockSpec((tm, F_pad), lambda i: (i, 0)),
                pl.BlockSpec((F_pad, H_pad), lambda i: (0, 0)),
                pl.BlockSpec((1, H_pad), lambda i: (0, 0)),
                pl.BlockSpec((H_pad, C_pad), lambda i: (0, 0)),
                pl.BlockSpec((1, C_pad), lambda i: (0, 0)),
            ],
            out_specs=pl.BlockSpec((tm, C_pad), lambda i: (i, 0)),
        ),
        compiler_params=pltpu.CompilerParams(
            dimension_semantics=("parallel",),
            vmem_limit_bytes=vmem_limit),
        cost_estimate=pl.CostEstimate(
            flops=2 * N_pad * (F_pad * H_pad + H_pad * C_pad),
            transcendentals=0,
            bytes_accessed=(x_p.size * 2 + w1_p.size * 2 + w2_p.size * 2
                            + 2 * N_pad * C_pad * 4)),
    )(x_p, w1_p, b1_p, w2_p, b2_p)

    if K == 0:
        # TODO(synk): K == 0 (no propagation) handled with plain JAX log_softmax.
        return jax.nn.log_softmax(h0[:N, :C], axis=1)

    # ---------------- pass 2..K+1: APPNP propagation ---------------- #
    prop_cost = pl.CostEstimate(
        flops=2 * N_pad * N_pad * C_pad + 3 * N_pad * C_pad,
        transcendentals=2 * N_pad * C_pad,
        bytes_accessed=a_p.size * 2 + 3 * N_pad * C_pad * 4,
    )

    def make_prop(final):
        return pl.pallas_call(
            functools.partial(prop_kernel, alpha=float(alpha),
                              num_classes=C, apply_log_softmax=final),
            out_shape=jax.ShapeDtypeStruct((N_pad, C_pad), jnp.float32),
            grid_spec=pltpu.PrefetchScalarGridSpec(
                num_scalar_prefetch=0,
                grid=(n_row, n_k),
                in_specs=[
                    pl.BlockSpec((tm, tk), lambda i, k: (i, k)),        # A tile
                    pl.BlockSpec((tk, C_pad), lambda i, k: (k, 0)),     # Z tile
                    pl.BlockSpec((tm, C_pad), lambda i, k: (i, 0)),     # H0 tile
                ],
                out_specs=pl.BlockSpec((tm, C_pad), lambda i, k: (i, 0)),
                scratch_shapes=[pltpu.VMEM((tm, C_pad), jnp.float32)],
            ),
            compiler_params=pltpu.CompilerParams(
                dimension_semantics=("parallel", "arbitrary"),
                vmem_limit_bytes=vmem_limit),
            cost_estimate=prop_cost,
        )

    prop_step = make_prop(False)
    prop_last = make_prop(True)

    z = h0
    for step in range(K):
        z = (prop_last if step == K - 1 else prop_step)(a_p, z, h0)

    return z[:N, :C]


# --------------------------------------------------------------------------- #
# Glue JAX: dense normalized adjacency  D^{-1/2} (A + I) D^{-1/2}
# --------------------------------------------------------------------------- #
def build_normalized_adjacency(edge_index, num_nodes):
    src, dst = edge_index[0], edge_index[1]
    a = jnp.zeros((num_nodes, num_nodes), jnp.float32)
    a = a.at[dst, src].set(1.0)                          # message: src -> dst
    a_hat = a + jnp.eye(num_nodes, dtype=jnp.float32)    # self-loops
    deg = jnp.sum(a_hat, axis=1)
    d_inv_sqrt = jnp.where(deg > 0, 1.0 / jnp.sqrt(deg), 0.0)
    return d_inv_sqrt[:, None] * a_hat * d_inv_sqrt[None, :]


if __name__ == "__main__":
    # deterministic, small-but-non-trivial problem (exercises a 2x2 tile grid)
    num_nodes = 300
    num_features = 16
    hidden = 64
    num_classes = 7
    K = 10
    alpha = 0.1

    key = jax.random.PRNGKey(0)
    k_x, k_w1, k_b1, k_w2, k_b2 = jax.random.split(key, 5)

    x = jax.random.normal(k_x, (num_nodes, num_features), jnp.float32)

    # deterministic bidirectional ring graph with a few chords
    idx = jnp.arange(num_nodes)
    src = jnp.concatenate([idx, (idx + 1) % num_nodes, idx, (idx + 7) % num_nodes])
    dst = jnp.concatenate([(idx + 1) % num_nodes, idx, (idx + 7) % num_nodes, idx])
    edge_index = jnp.stack([src, dst], axis=0)           # (2, E)

    a_norm = build_normalized_adjacency(edge_index, num_nodes)

    # Linear layer params (torch.nn.Linear default init: U(-1/sqrt(fan_in), ...))
    lim1 = 1.0 / jnp.sqrt(jnp.float32(num_features))
    w1 = jax.random.uniform(k_w1, (num_features, hidden), jnp.float32, -lim1, lim1)
    b1 = jax.random.uniform(k_b1, (hidden,), jnp.float32, -lim1, lim1)
    lim2 = 1.0 / jnp.sqrt(jnp.float32(hidden))
    w2 = jax.random.uniform(k_w2, (hidden, num_classes), jnp.float32, -lim2, lim2)
    b2 = jax.random.uniform(k_b2, (num_classes,), jnp.float32, -lim2, lim2)

    out = appnp_net_forward(x, a_norm, w1, b1, w2, b2, K=K, alpha=alpha, tile=256)
    out = jax.block_until_ready(out)

    # pure-JAX reference mimicking the kernel's bf16-operand / f32-accumulate math
    def bdot(p, q):
        return jnp.dot(p.astype(jnp.bfloat16), q.astype(jnp.bfloat16),
                       preferred_element_type=jnp.float32)

    h_ref = jnp.maximum(bdot(x, w1) + b1[None, :], 0.0)
    h0_ref = bdot(h_ref, w2) + b2[None, :]
    z_ref = h0_ref
    for _ in range(K):
        z_ref = (1.0 - alpha) * bdot(a_norm, z_ref) + alpha * h0_ref
    ref = jax.nn.log_softmax(z_ref, axis=1)

    assert out.shape == (num_nodes, num_classes)
    max_err = float(jnp.max(jnp.abs(out - ref)))
    assert jnp.allclose(out, ref, atol=5e-3, rtol=5e-3), f"mismatch vs ref: {max_err}"

    print("KERNEL_OK")
</pallas_src>

<mosaic_0001>
module attributes {stable_mosaic.version = 11 : i64} {
  func.func @mlp_kernel(%arg0: i32, %arg1: memref<256x128xbf16, #tpu.memory_space<vmem>>, %arg2: memref<128x128xbf16, #tpu.memory_space<vmem>>, %arg3: memref<1x128xf32, #tpu.memory_space<vmem>>, %arg4: memref<128x128xbf16, #tpu.memory_space<vmem>>, %arg5: memref<1x128xf32, #tpu.memory_space<vmem>>, %arg6: memref<256x128xf32, #tpu.memory_space<vmem>>) attributes {dimension_semantics = [#tpu.dimension_semantics<parallel>], iteration_bounds = array<i64: 2>, scalar_prefetch = 0 : i64, scratch_operands = 0 : i64, tpu.core_type = #tpu.core_type<tc>, window_params = [{transform_indices = @transform_0, window_bounds = array<i64: 256, 128>}, {pipeline_mode = #tpu.pipeline_mode<synchronous>, transform_indices = @transform_1, window_bounds = array<i64: 128, 128>}, {pipeline_mode = #tpu.pipeline_mode<synchronous>, transform_indices = @transform_2, window_bounds = array<i64: 1, 128>}, {pipeline_mode = #tpu.pipeline_mode<synchronous>, transform_indices = @transform_3, window_bounds = array<i64: 128, 128>}, {pipeline_mode = #tpu.pipeline_mode<synchronous>, transform_indices = @transform_4, window_bounds = array<i64: 1, 128>}, {transform_indices = @transform_5, window_bounds = array<i64: 256, 128>}]} {
    %c0 = arith.constant 0 : index
    %c0_0 = arith.constant 0 : index
    %0 = vector.load %arg1[%c0, %c0_0] : memref<256x128xbf16, #tpu.memory_space<vmem>>, vector<256x128xbf16>
    %c0_1 = arith.constant 0 : index
    %c0_2 = arith.constant 0 : index
    %1 = vector.load %arg2[%c0_1, %c0_2] : memref<128x128xbf16, #tpu.memory_space<vmem>>, vector<128x128xbf16>
    %cst = arith.constant dense<0.000000e+00> : vector<256x128xf32>
    %2 = tpu.matmul %0, %1, %cst {dimension_numbers = #tpu.dot_dimension_numbers<[1], [0], [0], [1], [0, 0, 1, 1], [], []>} : vector<256x128xbf16>, vector<128x128xbf16>, vector<256x128xf32> -> vector<256x128xf32>
    %c0_3 = arith.constant 0 : index
    %c0_4 = arith.constant 0 : index
    %3 = vector.load %arg3[%c0_3, %c0_4] : memref<1x128xf32, #tpu.memory_space<vmem>>, vector<1x128xf32>
    %4 = vector.broadcast %3 : vector<1x128xf32> to vector<256x128xf32>
    %5 = arith.addf %2, %4 : vector<256x128xf32>
    %cst_5 = arith.constant 0.000000e+00 : f32
    %6 = vector.broadcast %cst_5 : f32 to vector<256x128xf32>
    %7 = arith.maximumf %5, %6 : vector<256x128xf32>
    %8 = arith.truncf %7 : vector<256x128xf32> to vector<256x128xbf16>
    %c0_6 = arith.constant 0 : index
    %c0_7 = arith.constant 0 : index
    %9 = vector.load %arg4[%c0_6, %c0_7] : memref<128x128xbf16, #tpu.memory_space<vmem>>, vector<128x128xbf16>
    %cst_8 = arith.constant dense<0.000000e+00> : vector<256x128xf32>
    %10 = tpu.matmul %8, %9, %cst_8 {dimension_numbers = #tpu.dot_dimension_numbers<[1], [0], [0], [1], [0, 0, 1, 1], [], []>} : vector<256x128xbf16>, vector<128x128xbf16>, vector<256x128xf32> -> vector<256x128xf32>
    %c0_9 = arith.constant 0 : index
    %c0_10 = arith.constant 0 : index
    %11 = vector.load %arg5[%c0_9, %c0_10] : memref<1x128xf32, #tpu.memory_space<vmem>>, vector<1x128xf32>
    %12 = vector.broadcast %11 : vector<1x128xf32> to vector<256x128xf32>
    %13 = arith.addf %10, %12 : vector<256x128xf32>
    %c0_11 = arith.constant 0 : index
    %c0_12 = arith.constant 0 : index
    %14 = vector.load %arg6[%c0_11, %c0_12] : memref<256x128xf32, #tpu.memory_space<vmem>>, vector<256x128xf32>
    tpu.vector_store %arg6[%c0_11, %c0_12], %13 {strides = array<i32>} : memref<256x128xf32, #tpu.memory_space<vmem>>, vector<256x128xf32>,
    return
  }
  func.func @transform_0(%arg0: i32) -> (i32, i32) {
    %c0_i32 = arith.constant 0 : i32
    %c0_i32_0 = arith.constant 0 : i32
    return %arg0, %c0_i32 : i32, i32
  }
  func.func @transform_1(%arg0: i32) -> (i32, i32) {
    %c0_i32 = arith.constant 0 : i32
    %c0_i32_0 = arith.constant 0 : i32
    %c0_i32_1 = arith.constant 0 : i32
    return %c0_i32, %c0_i32_0 : i32, i32
  }
  func.func @transform_2(%arg0: i32) -> (i32, i32) {
    %c0_i32 = arith.constant 0 : i32
    %c0_i32_0 = arith.constant 0 : i32
    %c0_i32_1 = arith.constant 0 : i32
    return %c0_i32, %c0_i32_0 : i32, i32
  }
  func.func @transform_3(%arg0: i32) -> (i32, i32) {
    %c0_i32 = arith.constant 0 : i32
    %c0_i32_0 = arith.constant 0 : i32
    %c0_i32_1 = arith.constant 0 : i32
    return %c0_i32, %c0_i32_0 : i32, i32
  }
  func.func @transform_4(%arg0: i32) -> (i32, i32) {
    %c0_i32 = arith.constant 0 : i32
    %c0_i32_0 = arith.constant 0 : i32
    %c0_i32_1 = arith.constant 0 : i32
    return %c0_i32, %c0_i32_0 : i32, i32
  }
  func.func @transform_5(%arg0: i32) -> (i32, i32) {
    %c0_i32 = arith.constant 0 : i32
    %c0_i32_0 = arith.constant 0 : i32
    return %arg0, %c0_i32 : i32, i32
  }
}

</mosaic_0001>

<llo_original>
// kernel: tpu_custom_call.1
$region0: #{tpu_custom_call.1}
  #allocation0 [shape = 'u32[]', space=smem, size = 0x4, offset = 0x4, fixed_abs, tag = 'smem constant byte address 0x4 - core index']
  #allocation1 [shape = 'u32[72,128]{1,0:T(1,128)}', space=vmem, size = 0x9000, scoped, tag = 'internal scratch']
  %s0 = inlined_call_operand.hbm [shape: bf16[512,128], index: 0, kind: input, shape index: {}]
  %s1 = inlined_call_operand.hbm [shape: bf16[128,128], index: 1, kind: input, shape index: {}]
  %s2 = inlined_call_operand.vmem [shape: f32[1,128], index: 2, kind: input, shape index: {}]
  %s3 = inlined_call_operand.hbm [shape: bf16[128,128], index: 3, kind: input, shape index: {}]
  %s4 = inlined_call_operand.vmem [shape: f32[1,128], index: 4, kind: input, shape index: {}]
  %s5 = inlined_call_operand.hbm [shape: f32[512,128], index: 5, kind: output, shape index: {}]
  %s6 = sld [smem:[#allocation0]]
  $region65: #{tpu_custom_call.1} parent=0
    _
  %s8 = ssub.s32 1, %s6
  %s9 = scalar_select 0, %s8, %s6
  $region1: #{tpu_custom_call.1} parent=0
    #allocation2 [shape = 'u8[131072]{0}', space=vmem, size = 0x20000, scoped, tag = 'input window, operand 0']
    #allocation3 [shape = 's32[2]{0}', space=sflag, size = 0x8, scoped, tag = 'scoped memory for tpu_custom_call.1']
    #allocation4 [shape = 's32[2]{0}', space=sflag, size = 0x8, scoped, tag = 'scoped memory for tpu_custom_call.1']
    #allocation5 [shape = 'u8[32768]{0}', space=vmem, size = 0x8000, scoped, tag = 'input window, operand 1, single buffered']
    #allocation6 [shape = 's32[1]{0}', space=sflag, size = 0x4, scoped, tag = 'scoped memory for tpu_custom_call.1']
    #allocation7 [shape = 'u8[32768]{0}', space=vmem, size = 0x8000, scoped, tag = 'input window, operand 3, single buffered']
    #allocation8 [shape = 'u8[262144]{0}', space=vmem, size = 0x40000, scoped, tag = 'output window, operand 0']
    %10 = vsyncpa [#allocation3], 0
    %s11 = scalar_lea.sflag [#allocation3], 1
    %12 = vsyncpa %s11, 0
    %13 = vsyncpa [#allocation6], 0
    %14 = vsyncpa [#allocation4], 0
    %s15 = scalar_lea.sflag [#allocation4], 1
    %16 = vsyncpa %s15, 0
    loop: start=0, step=1, limit=4
    $region2: #{tpu_custom_call.1} parent=1 // loop_pre_header
      _
    $region3: #{tpu_custom_call.1} parent=1 // loop_header
      %s18 = sphi 0, %s22
      %p19 = scmp.ge.s32.totalorder %s18, 4
      %s28 = sphi 0, %s30
      %s31 = sphi 0, %s28
      %s32 = sphi 0, %s31
      %s48 = sphi 0, %s32
      %s52 = sphi 0, %s52
      %s54 = sphi 0, %s52
      %s55 = sphi 0, %s54
      %s69 = sphi 0, %s55
      %s73 = sphi 0, %s73
      %s75 = sphi 0, %s73
      %s76 = sphi 0, %s75
      %s90 = sphi 0, %s76
      %s94 = sphi 0, %s94
      %s96 = sphi 0, %s94
      %s97 = sphi 0, %s96
      %s111 = sphi 0, %s97
      %s115 = sphi 0, %s115
      %s117 = sphi 0, %s115
      %s118 = sphi 0, %s117
      %s132 = sphi 0, %s118
      %s138 = sphi 0, %s140
      %s141 = sphi 0, %s138
      %s142 = sphi 0, %s141
      %s158 = sphi 0, %s142
    $region4: #{tpu_custom_call.1} parent=1 // loop_header_branch
      %21 = sbr.rel (%p19) target = $region8
    $region5: #{tpu_custom_call.1} parent=1 // loop_body
      %s23 = ssub.s32 %s18, 1
      %s24 = ssub.s32 %s18, 2
      %s25 = sadd.s32 %s18, 1
      %s26 = ssub.s32 %s18, %s25
      %p27 = scmp.eq.s32.totalorder %s26, 0
      %s29 = sadd.s32 %s28, 1
      %s30 = scalar_select %p27, %s28, %s29
      %p33 = pneg %p27
      %p34 = scmp.eq.s32.totalorder %s18, 1
      %p35 = por %p33, %p34
      %p36 = scmp.ne.s32.totalorder %s28, %s31
      %p37 = scmp.eq.s32.totalorder %s18, 0
      %p38 = por %p36, %p37
      %p39 = scmp.ne.s32.totalorder %s28, %s31
      %p40 = scmp.eq.s32.totalorder %s23, 1
      %p41 = por %p39, %p40
      %p42 = scmp.ne.s32.totalorder %s31, %s32
      %p43 = scmp.eq.s32.totalorder %s23, 0
      %p44 = por %p42, %p43
      %p45 = scmp.ne.s32.totalorder %s31, %s32
      %p46 = scmp.eq.s32.totalorder %s24, 1
      %p47 = por %p45, %p46
      %p49 = scmp.ne.s32.totalorder %s32, %s48
      %p50 = scmp.eq.s32.totalorder %s24, 0
      %p51 = por %p49, %p50
      %s53 = sadd.s32 %s52, 1
      %p56 = scmp.eq.s32.totalorder %s18, 1
      %p57 = scmp.ne.s32.totalorder %s52, %s54
      %p58 = scmp.eq.s32.totalorder %s18, 0
      %p59 = por %p57, %p58
      %p60 = scmp.ne.s32.totalorder %s52, %s54
      %p61 = scmp.eq.s32.totalorder %s23, 1
      %p62 = por %p60, %p61
      %p63 = scmp.ne.s32.totalorder %s54, %s55
      %p64 = scmp.eq.s32.totalorder %s23, 0
      %p65 = por %p63, %p64
      %p66 = scmp.ne.s32.totalorder %s54, %s55
      %p67 = scmp.eq.s32.totalorder %s24, 1
      %p68 = por %p66, %p67
      %p70 = scmp.ne.s32.totalorder %s55, %s69
      %p71 = scmp.eq.s32.totalorder %s24, 0
      %p72 = por %p70, %p71
      %s74 = sadd.s32 %s73, 1
      %p77 = scmp.eq.s32.totalorder %s18, 1
      %p78 = scmp.ne.s32.totalorder %s73, %s75
      %p79 = scmp.eq.s32.totalorder %s18, 0
      %p80 = por %p78, %p79
      %p81 = scmp.ne.s32.totalorder %s73, %s75
      %p82 = scmp.eq.s32.totalorder %s23, 1
      %p83 = por %p81, %p82
      %p84 = scmp.ne.s32.totalorder %s75, %s76
      %p85 = scmp.eq.s32.totalorder %s23, 0
      %p86 = por %p84, %p85
      %p87 = scmp.ne.s32.totalorder %s75, %s76
      %p88 = scmp.eq.s32.totalorder %s24, 1
      %p89 = por %p87, %p88
      %p91 = scmp.ne.s32.totalorder %s76, %s90
      %p92 = scmp.eq.s32.totalorder %s24, 0
      %p93 = por %p91, %p92
      %s95 = sadd.s32 %s94, 1
      %p98 = scmp.eq.s32.totalorder %s18, 1
      %p99 = scmp.ne.s32.totalorder %s94, %s96
      %p100 = scmp.eq.s32.totalorder %s18, 0
      %p101 = por %p99, %p100
      %p102 = scmp.ne.s32.totalorder %s94, %s96
      %p103 = scmp.eq.s32.totalorder %s23, 1
      %p104 = por %p102, %p103
      %p105 = scmp.ne.s32.totalorder %s96, %s97
      %p106 = scmp.eq.s32.totalorder %s23, 0
      %p107 = por %p105, %p106
      %p108 = scmp.ne.s32.totalorder %s96, %s97
      %p109 = scmp.eq.s32.totalorder %s24, 1
      %p110 = por %p108, %p109
      %p112 = scmp.ne.s32.totalorder %s97, %s111
      %p113 = scmp.eq.s32.totalorder %s24, 0
      %p114 = por %p112, %p113
      %s116 = sadd.s32 %s115, 1
      %p119 = scmp.eq.s32.totalorder %s18, 1
      %p120 = scmp.ne.s32.totalorder %s115, %s117
      %p121 = scmp.eq.s32.totalorder %s18, 0
      %p122 = por %p120, %p121
      %p123 = scmp.ne.s32.totalorder %s115, %s117
      %p124 = scmp.eq.s32.totalorder %s23, 1
      %p125 = por %p123, %p124
      %p126 = scmp.ne.s32.totalorder %s117, %s118
      %p127 = scmp.eq.s32.totalorder %s23, 0
      %p128 = por %p126, %p127
      %p129 = scmp.ne.s32.totalorder %s117, %s118
      %p130 = scmp.eq.s32.totalorder %s24, 1
      %p131 = por %p129, %p130
      %p133 = scmp.ne.s32.totalorder %s118, %s132
      %p134 = scmp.eq.s32.totalorder %s24, 0
      %p135 = por %p133, %p134
      %s136 = ssub.s32 %s18, %s25
      %p137 = scmp.eq.s32.totalorder %s136, 0
      %s139 = sadd.s32 %s138, 1
      %s140 = scalar_select %p137, %s138, %s139
      %p143 = pneg %p137
      %p144 = scmp.eq.s32.totalorder %s18, 1
      %p145 = por %p143, %p144
      %p146 = scmp.ne.s32.totalorder %s138, %s141
      %p147 = scmp.eq.s32.totalorder %s18, 0
      %p148 = por %p146, %p147
      %p149 = scmp.ne.s32.totalorder %s138, %s141
      %p150 = scmp.eq.s32.totalorder %s23, 1
      %p151 = por %p149, %p150
      %p152 = scmp.ne.s32.totalorder %s141, %s142
      %p153 = scmp.eq.s32.totalorder %s23, 0
      %p154 = por %p152, %p153
      %p155 = scmp.ne.s32.totalorder %s141, %s142
      %p156 = scmp.eq.s32.totalorder %s24, 1
      %p157 = por %p155, %p156
      %p159 = scmp.ne.s32.totalorder %s142, %s158
      %p160 = scmp.eq.s32.totalorder %s24, 0
      %p161 = por %p159, %p160
      %p162 = scmp.le.s32.totalorder 1, %s18
      %p163 = scmp.lt.s32.totalorder %s18, 3
      %p164 = pnand %p162, %p163
      %p165 = pneg %p164
      // Predicated region
      $region9: #{tpu_custom_call.1} parent=5 // pred_check
        _
      $region10: #{tpu_custom_call.1} parent=5 // pred_check_branch
        %167 = sbr.rel (%p164) target = $region12
      $region11: #{tpu_custom_call.1} parent=5 // pred_region
        %s168 = ssub.s32 %s18, 1
        // Predicated region
        $region13: #{tpu_custom_call.1} parent=11 // pred_check
          %p169 = pneg %p65
        $region14: #{tpu_custom_call.1} parent=11 // pred_check_branch
          %171 = sbr.rel (%p169) target = $region16
        $region15: #{tpu_custom_call.1} parent=11 // pred_region
          %173 = vsyncadd [#allocation6], 0
          %s174 = sshll.u32 %s1, 4
          %s175 = int_to_ptr.hbm [resolvable:$true] %s174
          %s176 = sshll.u32 [#allocation5], 4
          %s177 = int_to_ptr.vmem [resolvable:$true] %s176
          %182 = dma.hbm_to_vmem [thread:$0]  %s175, 1024, %s177, [#allocation6], 64, 64, 4
        $region16: #{tpu_custom_call.1} parent=11 // pred_fallthru
          _
        // Predicated region
        $region17: #{tpu_custom_call.1} parent=11 // pred_check
          %p183 = pneg %p86
        $region18: #{tpu_custom_call.1} parent=11 // pred_check_branch
          %185 = sbr.rel (%p183) target = $region20
        $region19: #{tpu_custom_call.1} parent=11 // pred_region
          _
        $region20: #{tpu_custom_call.1} parent=11 // pred_fallthru
          _
        // Predicated region
        $region21: #{tpu_custom_call.1} parent=11 // pred_check
          %p186 = pneg %p107
        $region22: #{tpu_custom_call.1} parent=11 // pred_check_branch
          %188 = sbr.rel (%p186) target = $region24
        $region23: #{tpu_custom_call.1} parent=11 // pred_region
          %190 = vsyncadd [#allocation6], 0
          %s191 = sshll.u32 %s3, 4
          %s192 = int_to_ptr.hbm [resolvable:$true] %s191
          %s193 = sshll.u32 [#allocation7], 4
          %s194 = int_to_ptr.vmem [resolvable:$true] %s193
          %199 = dma.hbm_to_vmem [thread:$0]  %s192, 1024, %s194, [#allocation6], 64, 64, 4
        $region24: #{tpu_custom_call.1} parent=11 // pred_fallthru
          _
        // Predicated region
        $region25: #{tpu_custom_call.1} parent=11 // pred_check
          %p200 = pneg %p128
        $region26: #{tpu_custom_call.1} parent=11 // pred_check_branch
          %202 = sbr.rel (%p200) target = $region28
        $region27: #{tpu_custom_call.1} parent=11 // pred_region
          _
        $region28: #{tpu_custom_call.1} parent=11 // pred_fallthru
          _
      $region12: #{tpu_custom_call.1} parent=5 // pred_fallthru
        _
      %p203 = scmp.lt.s32.totalorder %s18, 2
      // Predicated region
      $region29: #{tpu_custom_call.1} parent=5 // pred_check
        %p204 = pneg %p203
      $region30: #{tpu_custom_call.1} parent=5 // pred_check_branch
        %206 = sbr.rel (%p204) target = $region32
      $region31: #{tpu_custom_call.1} parent=5 // pred_region
        // Predicated region
        $region33: #{tpu_custom_call.1} parent=31 // pred_check
          %p207 = pneg %p38
        $region34: #{tpu_custom_call.1} parent=31 // pred_check_branch
          %209 = sbr.rel (%p207) target = $region36
        $region35: #{tpu_custom_call.1} parent=31 // pred_region
          %s210 = sand.u32 %s28, 1
          %s211 = scalar_lea.sflag [#allocation3], %s210
          %s212 = sand.u32 %s28, 1
          %s213 = smul.addr %s212, 128
          %s214 = scalar_lea.vmem [#allocation2], %s213
          %s215 = smul.u32 32, %s18
          %217 = vsyncadd %s211, 0
          %s218 = smul.addr %s215, 4
          %s219 = scalar_lea.hbm %s0, %s218
          %s220 = sshll.u32 %s219, 4
          %s221 = int_to_ptr.hbm [resolvable:$true] %s220
          %s222 = sshll.u32 %s214, 4
          %s223 = int_to_ptr.vmem [resolvable:$true] %s222
          %228 = dma.hbm_to_vmem [thread:$0]  %s221, 2048, %s223, %s211, 64, 64, 4
        $region36: #{tpu_custom_call.1} parent=31 // pred_fallthru
          _
      $region32: #{tpu_custom_call.1} parent=5 // pred_fallthru
        _
      %p229 = scmp.le.s32.totalorder 1, %s18
      %p230 = scmp.lt.s32.totalorder %s18, 3
      %p231 = pnand %p229, %p230
      %p232 = pneg %p231
      // Predicated region
      $region37: #{tpu_custom_call.1} parent=5 // pred_check
        _
      $region38: #{tpu_custom_call.1} parent=5 // pred_check_branch
        %234 = sbr.rel (%p231) target = $region40
      $region39: #{tpu_custom_call.1} parent=5 // pred_region
        %s235 = ssub.s32 %s18, 1
        %s236 = sand.u32 %s31, 1
        %s237 = scalar_lea.sflag [#allocation3], %s236
        %s238 = sand.u32 %s31, 1
        %s239 = smul.addr %s238, 128
        %s240 = scalar_lea.vmem [#allocation2], %s239
        // Predicated region
        $region41: #{tpu_custom_call.1} parent=39 // pred_check
          %p241 = pneg %p44
        $region42: #{tpu_custom_call.1} parent=39 // pred_check_branch
          %243 = sbr.rel (%p241) target = $region44
        $region43: #{tpu_custom_call.1} parent=39 // pred_region
          %245 = dma.done %s237, 2048
        $region44: #{tpu_custom_call.1} parent=39 // pred_fallthru
          _
        // Predicated region
        $region45: #{tpu_custom_call.1} parent=39 // pred_check
          %p246 = pneg %p65
        $region46: #{tpu_custom_call.1} parent=39 // pred_check_branch
          %248 = sbr.rel (%p246) target = $region48
        $region47: #{tpu_custom_call.1} parent=39 // pred_region
          %250 = dma.done [#allocation6], 1024
        $region48: #{tpu_custom_call.1} parent=39 // pred_fallthru
          _
        // Predicated region
        $region49: #{tpu_custom_call.1} parent=39 // pred_check
          %p251 = pneg %p107
        $region50: #{tpu_custom_call.1} parent=39 // pred_check_branch
          %253 = sbr.rel (%p251) target = $region52
        $region51: #{tpu_custom_call.1} parent=39 // pred_region
          %255 = dma.done [#allocation6], 1024
        $region52: #{tpu_custom_call.1} parent=39 // pred_fallthru
          _
        %s256 = sand.u32 %s31, 1
        %s257 = scalar_lea.sflag [#allocation3], %s256
        %s258 = sand.u32 %s31, 1
        %s259 = smul.addr %s258, 128
        %s260 = scalar_lea.vmem [#allocation2], %s259
        %p261 = pneg %p44
        %p262 = pneg %p41
        %p263 = pneg %p65
        %p264 = pneg %p62
        %p265 = pneg %p86
        %p266 = pneg %p83
        %p267 = pneg %p107
        %p268 = pneg %p104
        %p269 = pneg %p128
        %p270 = pneg %p125
        %p271 = pneg %p154
        %p272 = pneg %p151
        %s273 = sand.u32 %s141, 1
        %s274 = scalar_lea.sflag [#allocation4], %s273
        %s275 = sand.u32 %s141, 1
        %s276 = smul.addr %s275, 256
        %s277 = scalar_lea.vmem [#allocation8], %s276
        %s278 = smul.u32 32, %s23
        %s279 = smul.u32 32, %s23
        %v280 = vld [vmem:[%s240] sm:$0xf]
        %v281 = vld [vmem:[%s240 + $0x4] sm:$0xf]
        %v282 = vld [vmem:[%s240 + $0x8] sm:$0xf]
        %v283 = vld [vmem:[%s240 + $0xc] sm:$0xf]
        %v284 = vld [vmem:[%s240 + $0x10] sm:$0xf]
        %v285 = vld [vmem:[%s240 + $0x14] sm:$0xf]
        %v286 = vld [vmem:[%s240 + $0x18] sm:$0xf]
        %v287 = vld [vmem:[%s240 + $0x1c] sm:$0xf]
        %v288 = vld [vmem:[%s240 + $0x20] sm:$0xf]
        %v289 = vld [vmem:[%s240 + $0x24] sm:$0xf]
        %v290 = vld [vmem:[%s240 + $0x28] sm:$0xf]
        %v291 = vld [vmem:[%s240 + $0x2c] sm:$0xf]
        %v292 = vld [vmem:[%s240 + $0x30] sm:$0xf]
        %v293 = vld [vmem:[%s240 + $0x34] sm:$0xf]
        %v294 = vld [vmem:[%s240 + $0x38] sm:$0xf]
        %v295 = vld [vmem:[%s240 + $0x3c] sm:$0xf]
        %v296 = vld [vmem:[%s240 + $0x40] sm:$0xf]
        %v297 = vld [vmem:[%s240 + $0x44] sm:$0xf]
        %v298 = vld [vmem:[%s240 + $0x48] sm:$0xf]
        %v299 = vld [vmem:[%s240 + $0x4c] sm:$0xf]
        %v300 = vld [vmem:[%s240 + $0x50] sm:$0xf]
        %v301 = vld [vmem:[%s240 + $0x54] sm:$0xf]
        %v302 = vld [vmem:[%s240 + $0x58] sm:$0xf]
        %v303 = vld [vmem:[%s240 + $0x5c] sm:$0xf]
        %v304 = vld [vmem:[%s240 + $0x60] sm:$0xf]
        %v305 = vld [vmem:[%s240 + $0x64] sm:$0xf]
        %v306 = vld [vmem:[%s240 + $0x68] sm:$0xf]
        %v307 = vld [vmem:[%s240 + $0x6c] sm:$0xf]
        %v308 = vld [vmem:[%s240 + $0x70] sm:$0xf]
        %v309 = vld [vmem:[%s240 + $0x74] sm:$0xf]
        %v310 = vld [vmem:[%s240 + $0x78] sm:$0xf]
        %v311 = vld [vmem:[%s240 + $0x7c] sm:$0xf]
        %v312 = vld [vmem:[#allocation5] sm:$0xf]
        %v313 = vld [vmem:[#allocation5 + $0x4] sm:$0xf]
        %v314 = vld [vmem:[#allocation5 + $0x8] sm:$0xf]
        %v315 = vld [vmem:[#allocation5 + $0xc] sm:$0xf]
        %v316 = vld [vmem:[#allocation5 + $0x10] sm:$0xf]
        %v317 = vld [vmem:[#allocation5 + $0x14] sm:$0xf]
        %v318 = vld [vmem:[#allocation5 + $0x18] sm:$0xf]
        %v319 = vld [vmem:[#allocation5 + $0x1c] sm:$0xf]
        %v320 = vld [vmem:[#allocation5 + $0x20] sm:$0xf]
        %v321 = vld [vmem:[#allocation5 + $0x24] sm:$0xf]
        %v322 = vld [vmem:[#allocation5 + $0x28] sm:$0xf]
        %v323 = vld [vmem:[#allocation5 + $0x2c] sm:$0xf]
        %v324 = vld [vmem:[#allocation5 + $0x30] sm:$0xf]
        %v325 = vld [vmem:[#allocation5 + $0x34] sm:$0xf]
        %v326 = vld [vmem:[#allocation5 + $0x38] sm:$0xf]
        %v327 = vld [vmem:[#allocation5 + $0x3c] sm:$0xf]
        %v328 = vld [vmem:[%s2] sm:$0x1]
        %v330 = vperm.slane %v328, 0
        %v364 = vunpack.c.l.b16 %v280
        %v365 = vunpack.c.l.b16 %v281
        %v366 = vunpack.c.l.b16 %v282
        %v367 = vunpack.c.l.b16 %v283
        %v368 = vunpack.c.l.b16 %v284
        %v369 = vunpack.c.l.b16 %v285
        %v370 = vunpack.c.l.b16 %v286
        %v371 = vunpack.c.l.b16 %v287
        %v372 = vunpack.c.l.b16 %v288
        %v373 = vunpack.c.l.b16 %v289
        %v374 = vunpack.c.l.b16 %v290
        %v375 = vunpack.c.l.b16 %v291
        %v376 = vunpack.c.l.b16 %v292
        %v377 = vunpack.c.l.b16 %v293
        %v378 = vunpack.c.l.b16 %v294
        %v379 = vunpack.c.l.b16 %v295
        %v380 = vunpack.c.l.b16 %v296
        %v381 = vunpack.c.l.b16 %v297
        %v382 = vunpack.c.l.b16 %v298
        %v383 = vunpack.c.l.b16 %v299
        %v384 = vunpack.c.l.b16 %v300
        %v385 = vunpack.c.l.b16 %v301
        %v386 = vunpack.c.l.b16 %v302
        %v387 = vunpack.c.l.b16 %v303
        %v388 = vunpack.c.l.b16 %v304
        %v389 = vunpack.c.l.b16 %v305
        %v390 = vunpack.c.l.b16 %v306
        %v391 = vunpack.c.l.b16 %v307
        %v392 = vunpack.c.l.b16 %v308
        %v393 = vunpack.c.l.b16 %v309
        %v394 = vunpack.c.l.b16 %v310
        %v395 = vunpack.c.l.b16 %v311
        %v396 = vpack.c.b16 %v365, %v364
        %v397 = vpack.c.b16 %v367, %v366
        %v398 = vpack.c.b16 %v369, %v368
        %v399 = vpack.c.b16 %v371, %v370
        %v400 = vpack.c.b16 %v373, %v372
        %v401 = vpack.c.b16 %v375, %v374
        %v402 = vpack.c.b16 %v377, %v376
        %v403 = vpack.c.b16 %v379, %v378
        %v404 = vpack.c.b16 %v381, %v380
        %v405 = vpack.c.b16 %v383, %v382
        %v406 = vpack.c.b16 %v385, %v384
        %v407 = vpack.c.b16 %v387, %v386
        %v408 = vpack.c.b16 %v389, %v388
        %v409 = vpack.c.b16 %v391, %v390
        %v410 = vpack.c.b16 %v393, %v392
        %v411 = vpack.c.b16 %v395, %v394
        %v444 = vunpack.c.l.b16 %v312
        %v445 = vunpack.c.l.b16 %v313
        %v446 = vunpack.c.l.b16 %v314
        %v447 = vunpack.c.l.b16 %v315
        %v448 = vunpack.c.l.b16 %v316
        %v449 = vunpack.c.l.b16 %v317
        %v450 = vunpack.c.l.b16 %v318
        %v451 = vunpack.c.l.b16 %v319
        %v452 = vunpack.c.l.b16 %v320
        %v453 = vunpack.c.l.b16 %v321
        %v454 = vunpack.c.l.b16 %v322
        %v455 = vunpack.c.l.b16 %v323
        %v456 = vunpack.c.l.b16 %v324
        %v457 = vunpack.c.l.b16 %v325
        %v458 = vunpack.c.l.b16 %v326
        %v459 = vunpack.c.l.b16 %v327
        %v460 = vpack.c.b16 %v445, %v444
        %v461 = vpack.c.b16 %v447, %v446
        %v462 = vpack.c.b16 %v449, %v448
        %v463 = vpack.c.b16 %v451, %v450
        %v464 = vpack.c.b16 %v453, %v452
        %v465 = vpack.c.b16 %v455, %v454
        %v466 = vpack.c.b16 %v457, %v456
        %v467 = vpack.c.b16 %v459, %v458
        %476 = vmatpush.bf16.msra.mxu0 %v467
        %477 = vmatpush.bf16.msra.mxu0 %v466
        %478 = vmatpush.bf16.msra.mxu0 %v465
        %479 = vmatpush.bf16.msra.mxu0 %v464
        %480 = vmatpush.bf16.msra.mxu0 %v463
        %481 = vmatpush.bf16.msra.mxu0 %v462
        %482 = vmatpush.bf16.msra.mxu0 %v461
        %483 = vmatpush.bf16.msra.mxu0 %v460
        %484 = vmatmul.bf16.gmra.mxu0 %v396
        %v485 = vpop.f32.mrf.mxu0
        %v486 = vadd.f32 %v330, %v485
        %v487 = vpop.f32.mrf.mxu0
        %v488 = vadd.f32 %v330, %v487
        %489 = vmatmul.bf16.gmra.mxu0 %v397
        %v490 = vpop.f32.mrf.mxu0
        %v491 = vadd.f32 %v330, %v490
        %v492 = vpop.f32.mrf.mxu0
        %v493 = vadd.f32 %v330, %v492
        %494 = vmatmul.bf16.gmra.mxu0 %v398
        %v495 = vpop.f32.mrf.mxu0
        %v496 = vadd.f32 %v330, %v495
        %v497 = vpop.f32.mrf.mxu0
        %v498 = vadd.f32 %v330, %v497
        %499 = vmatmul.bf16.gmra.mxu0 %v399
        %v500 = vpop.f32.mrf.mxu0
        %v501 = vadd.f32 %v330, %v500
        %v502 = vpop.f32.mrf.mxu0
        %v503 = vadd.f32 %v330, %v502
        %504 = vmatmul.bf16.gmra.mxu0 %v400
        %v505 = vpop.f32.mrf.mxu0
        %v506 = vadd.f32 %v330, %v505
        %v507 = vpop.f32.mrf.mxu0
        %v508 = vadd.f32 %v330, %v507
        %509 = vmatmul.bf16.gmra.mxu0 %v401
        %v510 = vpop.f32.mrf.mxu0
        %v511 = vadd.f32 %v330, %v510
        %v512 = vpop.f32.mrf.mxu0
        %v513 = vadd.f32 %v330, %v512
        %514 = vmatmul.bf16.gmra.mxu0 %v402
        %v515 = vpop.f32.mrf.mxu0
        %v516 = vadd.f32 %v330, %v515
        %v517 = vpop.f32.mrf.mxu0
        %v518 = vadd.f32 %v330, %v517
        %519 = vmatmul.bf16.gmra.mxu0 %v403
        %v520 = vpop.f32.mrf.mxu0
        %v521 = vadd.f32 %v330, %v520
        %v522 = vpop.f32.mrf.mxu0
        %v523 = vadd.f32 %v330, %v522
        %524 = vmatmul.bf16.gmra.mxu0 %v404
        %v525 = vpop.f32.mrf.mxu0
        %v526 = vadd.f32 %v330, %v525
        %v527 = vpop.f32.mrf.mxu0
        %v528 = vadd.f32 %v330, %v527
        %529 = vmatmul.bf16.gmra.mxu0 %v405
        %v530 = vpop.f32.mrf.mxu0
        %v531 = vadd.f32 %v330, %v530
        %v532 = vpop.f32.mrf.mxu0
        %v533 = vadd.f32 %v330, %v532
        %534 = vmatmul.bf16.gmra.mxu0 %v406
        %v535 = vpop.f32.mrf.mxu0
        %v536 = vadd.f32 %v330, %v535
        %v537 = vpop.f32.mrf.mxu0
        %v538 = vadd.f32 %v330, %v537
        %539 = vmatmul.bf16.gmra.mxu0 %v407
        %v540 = vpop.f32.mrf.mxu0
        %v541 = vadd.f32 %v330, %v540
        %v542 = vpop.f32.mrf.mxu0
        %v543 = vadd.f32 %v330, %v542
        %544 = vmatmul.bf16.gmra.mxu0 %v408
        %v545 = vpop.f32.mrf.mxu0
        %v546 = vadd.f32 %v330, %v545
        %v547 = vpop.f32.mrf.mxu0
        %v548 = vadd.f32 %v330, %v547
        %549 = vmatmul.bf16.gmra.mxu0 %v409
        %v550 = vpop.f32.mrf.mxu0
        %v551 = vadd.f32 %v330, %v550
        %v552 = vpop.f32.mrf.mxu0
        %v553 = vadd.f32 %v330, %v552
        %554 = vmatmul.bf16.gmra.mxu0 %v410
        %v555 = vpop.f32.mrf.mxu0
        %v556 = vadd.f32 %v330, %v555
        %v557 = vpop.f32.mrf.mxu0
        %v558 = vadd.f32 %v330, %v557
        %559 = vmatmul.bf16.gmra.mxu0 %v411
        %v560 = vpop.f32.mrf.mxu0
        %v561 = vadd.f32 %v330, %v560
        %v562 = vpop.f32.mrf.mxu0
        %v563 = vadd.f32 %v330, %v562
        %564 = vdwg.mxu0
        %v565 = vmax.f32 %v486, 0.0
        %v566 = vmax.f32 %v488, 0.0
        %v567 = vmax.f32 %v491, 0.0
        %v568 = vmax.f32 %v493, 0.0
        %v569 = vmax.f32 %v496, 0.0
        %v570 = vmax.f32 %v498, 0.0
        %v571 = vmax.f32 %v501, 0.0
        %v572 = vmax.f32 %v503, 0.0
        %v573 = vmax.f32 %v506, 0.0
        %v574 = vmax.f32 %v508, 0.0
        %v575 = vmax.f32 %v511, 0.0
        %v576 = vmax.f32 %v513, 0.0
        %v577 = vmax.f32 %v516, 0.0
        %v578 = vmax.f32 %v518, 0.0
        %v579 = vmax.f32 %v521, 0.0
        %v580 = vmax.f32 %v523, 0.0
        %v581 = vmax.f32 %v526, 0.0
        %v582 = vmax.f32 %v528, 0.0
        %v583 = vmax.f32 %v531, 0.0
        %v584 = vmax.f32 %v533, 0.0
        %v585 = vmax.f32 %v536, 0.0
        %v586 = vmax.f32 %v538, 0.0
        %v587 = vmax.f32 %v541, 0.0
        %v588 = vmax.f32 %v543, 0.0
        %v589 = vmax.f32 %v546, 0.0
        %v590 = vmax.f32 %v548, 0.0
        %v591 = vmax.f32 %v551, 0.0
        %v592 = vmax.f32 %v553, 0.0
        %v593 = vmax.f32 %v556, 0.0
        %v594 = vmax.f32 %v558, 0.0
        %v595 = vmax.f32 %v561, 0.0
        %v596 = vmax.f32 %v563, 0.0
        %v597 = vpack.c.bf16 %v566, %v565
        %v598 = vpack.c.bf16 %v568, %v567
        %v599 = vpack.c.bf16 %v570, %v569
        %v600 = vpack.c.bf16 %v572, %v571
        %v601 = vpack.c.bf16 %v574, %v573
        %v602 = vpack.c.bf16 %v576, %v575
        %v603 = vpack.c.bf16 %v578, %v577
        %v604 = vpack.c.bf16 %v580, %v579
        %v605 = vpack.c.bf16 %v582, %v581
        %v606 = vpack.c.bf16 %v584, %v583
        %v607 = vpack.c.bf16 %v586, %v585
        %v608 = vpack.c.bf16 %v588, %v587
        %v609 = vpack.c.bf16 %v590, %v589
        %v610 = vpack.c.bf16 %v592, %v591
        %v611 = vpack.c.bf16 %v594, %v593
        %v612 = vpack.c.bf16 %v596, %v595
        %v613 = vld [vmem:[#allocation7] sm:$0xf]
        %v614 = vld [vmem:[#allocation7 + $0x4] sm:$0xf]
        %v615 = vld [vmem:[#allocation7 + $0x8] sm:$0xf]
        %v616 = vld [vmem:[#allocation7 + $0xc] sm:$0xf]
        %v617 = vld [vmem:[#allocation7 + $0x10] sm:$0xf]
        %v618 = vld [vmem:[#allocation7 + $0x14] sm:$0xf]
        %v619 = vld [vmem:[#allocation7 + $0x18] sm:$0xf]
        %v620 = vld [vmem:[#allocation7 + $0x1c] sm:$0xf]
        %v621 = vld [vmem:[#allocation7 + $0x20] sm:$0xf]
        %v622 = vld [vmem:[#allocation7 + $0x24] sm:$0xf]
        %v623 = vld [vmem:[#allocation7 + $0x28] sm:$0xf]
        %v624 = vld [vmem:[#allocation7 + $0x2c] sm:$0xf]
        %v625 = vld [vmem:[#allocation7 + $0x30] sm:$0xf]
        %v626 = vld [vmem:[#allocation7 + $0x34] sm:$0xf]
        %v627 = vld [vmem:[#allocation7 + $0x38] sm:$0xf]
        %v628 = vld [vmem:[#allocation7 + $0x3c] sm:$0xf]
        %v629 = vld [vmem:[%s4] sm:$0x1]
        %v631 = vperm.slane %v629, 0
        %v649 = vunpack.c.l.b16 %v613
        %v650 = vunpack.c.l.b16 %v614
        %v651 = vunpack.c.l.b16 %v615
        %v652 = vunpack.c.l.b16 %v616
        %v653 = vunpack.c.l.b16 %v617
        %v654 = vunpack.c.l.b16 %v618
        %v655 = vunpack.c.l.b16 %v619
        %v656 = vunpack.c.l.b16 %v620
        %v657 = vunpack.c.l.b16 %v621
        %v658 = vunpack.c.l.b16 %v622
        %v659 = vunpack.c.l.b16 %v623
        %v660 = vunpack.c.l.b16 %v624
        %v661 = vunpack.c.l.b16 %v625
        %v662 = vunpack.c.l.b16 %v626
        %v663 = vunpack.c.l.b16 %v627
        %v664 = vunpack.c.l.b16 %v628
        %v665 = vpack.c.b16 %v650, %v649
        %v666 = vpack.c.b16 %v652, %v651
        %v667 = vpack.c.b16 %v654, %v653
        %v668 = vpack.c.b16 %v656, %v655
        %v669 = vpack.c.b16 %v658, %v657
        %v670 = vpack.c.b16 %v660, %v659
        %v671 = vpack.c.b16 %v662, %v661
        %v672 = vpack.c.b16 %v664, %v663
        %681 = vmatpush.bf16.msra.mxu0 %v672
        %682 = vmatpush.bf16.msra.mxu0 %v671
        %683 = vmatpush.bf16.msra.mxu0 %v670
        %684 = vmatpush.bf16.msra.mxu0 %v669
        %685 = vmatpush.bf16.msra.mxu0 %v668
        %686 = vmatpush.bf16.msra.mxu0 %v667
        %687 = vmatpush.bf16.msra.mxu0 %v666
        %688 = vmatpush.bf16.msra.mxu0 %v665
        %689 = vmatmul.bf16.gmra.mxu0 %v597
        %v690 = vpop.f32.mrf.mxu0
        %v691 = vadd.f32 %v631, %v690
        %v692 = vpop.f32.mrf.mxu0
        %v693 = vadd.f32 %v631, %v692
        %694 = vmatmul.bf16.gmra.mxu0 %v598
        %v695 = vpop.f32.mrf.mxu0
        %v696 = vadd.f32 %v631, %v695
        %v697 = vpop.f32.mrf.mxu0
        %v698 = vadd.f32 %v631, %v697
        %699 = vmatmul.bf16.gmra.mxu0 %v599
        %v700 = vpop.f32.mrf.mxu0
        %v701 = vadd.f32 %v631, %v700
        %v702 = vpop.f32.mrf.mxu0
        %v703 = vadd.f32 %v631, %v702
        %704 = vmatmul.bf16.gmra.mxu0 %v600
        %v705 = vpop.f32.mrf.mxu0
        %v706 = vadd.f32 %v631, %v705
        %v707 = vpop.f32.mrf.mxu0
        %v708 = vadd.f32 %v631, %v707
        %709 = vmatmul.bf16.gmra.mxu0 %v601
        %v710 = vpop.f32.mrf.mxu0
        %v711 = vadd.f32 %v631, %v710
        %v712 = vpop.f32.mrf.mxu0
        %v713 = vadd.f32 %v631, %v712
        %714 = vmatmul.bf16.gmra.mxu0 %v602
        %v715 = vpop.f32.mrf.mxu0
        %v716 = vadd.f32 %v631, %v715
        %v717 = vpop.f32.mrf.mxu0
        %v718 = vadd.f32 %v631, %v717
        %719 = vmatmul.bf16.gmra.mxu0 %v603
        %v720 = vpop.f32.mrf.mxu0
        %v721 = vadd.f32 %v631, %v720
        %v722 = vpop.f32.mrf.mxu0
        %v723 = vadd.f32 %v631, %v722
        %724 = vmatmul.bf16.gmra.mxu0 %v604
        %v725 = vpop.f32.mrf.mxu0
        %v726 = vadd.f32 %v631, %v725
        %v727 = vpop.f32.mrf.mxu0
        %v728 = vadd.f32 %v631, %v727
        %729 = vmatmul.bf16.gmra.mxu0 %v605
        %v730 = vpop.f32.mrf.mxu0
        %v731 = vadd.f32 %v631, %v730
        %v732 = vpop.f32.mrf.mxu0
        %v733 = vadd.f32 %v631, %v732
        %734 = vmatmul.bf16.gmra.mxu0 %v606
        %v735 = vpop.f32.mrf.mxu0
        %v736 = vadd.f32 %v631, %v735
        %v737 = vpop.f32.mrf.mxu0
        %v738 = vadd.f32 %v631, %v737
        %739 = vmatmul.bf16.gmra.mxu0 %v607
        %v740 = vpop.f32.mrf.mxu0
        %v741 = vadd.f32 %v631, %v740
        %v742 = vpop.f32.mrf.mxu0
        %v743 = vadd.f32 %v631, %v742
        %744 = vmatmul.bf16.gmra.mxu0 %v608
        %v745 = vpop.f32.mrf.mxu0
        %v746 = vadd.f32 %v631, %v745
        %v747 = vpop.f32.mrf.mxu0
        %v748 = vadd.f32 %v631, %v747
        %749 = vmatmul.bf16.gmra.mxu0 %v609
        %v750 = vpop.f32.mrf.mxu0
        %v751 = vadd.f32 %v631, %v750
        %v752 = vpop.f32.mrf.mxu0
        %v753 = vadd.f32 %v631, %v752
        %754 = vmatmul.bf16.gmra.mxu0 %v610
        %v755 = vpop.f32.mrf.mxu0
        %v756 = vadd.f32 %v631, %v755
        %v757 = vpop.f32.mrf.mxu0
        %v758 = vadd.f32 %v631, %v757
        %759 = vmatmul.bf16.gmra.mxu0 %v611
        %v760 = vpop.f32.mrf.mxu0
        %v761 = vadd.f32 %v631, %v760
        %v762 = vpop.f32.mrf.mxu0
        %v763 = vadd.f32 %v631, %v762
        %764 = vmatmul.bf16.gmra.mxu0 %v612
        %v765 = vpop.f32.mrf.mxu0
        %v766 = vadd.f32 %v631, %v765
        %v767 = vpop.f32.mrf.mxu0
        %v768 = vadd.f32 %v631, %v767
        %769 = vdwg.mxu0
        %770 = vst [vmem:[%s277] sm:$0xff] %v691
        %771 = vst [vmem:[%s277 + $0x8] sm:$0xff] %v693
        %772 = vst [vmem:[%s277 + $0x10] sm:$0xff] %v696
        %773 = vst [vmem:[%s277 + $0x18] sm:$0xff] %v698
        %774 = vst [vmem:[%s277 + $0x20] sm:$0xff] %v701
        %775 = vst [vmem:[%s277 + $0x28] sm:$0xff] %v703
        %776 = vst [vmem:[%s277 + $0x30] sm:$0xff] %v706
        %777 = vst [vmem:[%s277 + $0x38] sm:$0xff] %v708
        %778 = vst [vmem:[%s277 + $0x40] sm:$0xff] %v711
        %779 = vst [vmem:[%s277 + $0x48] sm:$0xff] %v713
        %780 = vst [vmem:[%s277 + $0x50] sm:$0xff] %v716
        %781 = vst [vmem:[%s277 + $0x58] sm:$0xff] %v718
        %782 = vst [vmem:[%s277 + $0x60] sm:$0xff] %v721
        %783 = vst [vmem:[%s277 + $0x68] sm:$0xff] %v723
        %784 = vst [vmem:[%s277 + $0x70] sm:$0xff] %v726
        %785 = vst [vmem:[%s277 + $0x78] sm:$0xff] %v728
        %786 = vst [vmem:[%s277 + $0x80] sm:$0xff] %v731
        %787 = vst [vmem:[%s277 + $0x88] sm:$0xff] %v733
        %788 = vst [vmem:[%s277 + $0x90] sm:$0xff] %v736
        %789 = vst [vmem:[%s277 + $0x98] sm:$0xff] %v738
        %790 = vst [vmem:[%s277 + $0xa0] sm:$0xff] %v741
        %791 = vst [vmem:[%s277 + $0xa8] sm:$0xff] %v743
        %792 = vst [vmem:[%s277 + $0xb0] sm:$0xff] %v746
        %793 = vst [vmem:[%s277 + $0xb8] sm:$0xff] %v748
        %794 = vst [vmem:[%s277 + $0xc0] sm:$0xff] %v751
        %795 = vst [vmem:[%s277 + $0xc8] sm:$0xff] %v753
        %796 = vst [vmem:[%s277 + $0xd0] sm:$0xff] %v756
        %797 = vst [vmem:[%s277 + $0xd8] sm:$0xff] %v758
        %798 = vst [vmem:[%s277 + $0xe0] sm:$0xff] %v761
        %799 = vst [vmem:[%s277 + $0xe8] sm:$0xff] %v763
        %800 = vst [vmem:[%s277 + $0xf0] sm:$0xff] %v766
        %801 = vst [vmem:[%s277 + $0xf8] sm:$0xff] %v768
        %s802 = sand.u32 %s141, 1
        %s803 = scalar_lea.sflag [#allocation4], %s802
        %s804 = sand.u32 %s141, 1
        %s805 = smul.addr %s804, 256
        %s806 = scalar_lea.vmem [#allocation8], %s805
        // Predicated region
        $region53: #{tpu_custom_call.1} parent=39 // pred_check
          %p807 = pneg %p151
        $region54: #{tpu_custom_call.1} parent=39 // pred_check_branch
          %809 = sbr.rel (%p807) target = $region56
        $region55: #{tpu_custom_call.1} parent=39 // pred_region
          %s810 = smul.u32 32, %s23
          %812 = vsyncadd %s803, 0
          %s813 = smul.addr %s810, 8
          %s814 = scalar_lea.hbm %s5, %s813
          %s815 = sshll.u32 %s806, 4
          %s816 = int_to_ptr.vmem [resolvable:$true] %s815
          %s817 = sshll.u32 %s814, 4
          %s818 = int_to_ptr.hbm [resolvable:$true] %s817
          %823 = dma.vmem_to_hbm [thread:$0]  %s816, 4096, %s818, %s803, 128, 128, 8
        $region56: #{tpu_custom_call.1} parent=39 // pred_fallthru
          _
      $region40: #{tpu_custom_call.1} parent=5 // pred_fallthru
        _
      %p824 = scmp.le.s32.totalorder 2, %s18
      // Predicated region
      $region57: #{tpu_custom_call.1} parent=5 // pred_check
        %p825 = pneg %p824
      $region58: #{tpu_custom_call.1} parent=5 // pred_check_branch
        %827 = sbr.rel (%p825) target = $region60
      $region59: #{tpu_custom_call.1} parent=5 // pred_region
        %s828 = ssub.s32 %s18, 2
        // Predicated region
        $region61: #{tpu_custom_call.1} parent=59 // pred_check
          %p829 = pneg %p157
        $region62: #{tpu_custom_call.1} parent=59 // pred_check_branch
          %831 = sbr.rel (%p829) target = $region64
        $region63: #{tpu_custom_call.1} parent=59 // pred_region
          %s832 = sand.u32 %s142, 1
          %s833 = scalar_lea.sflag [#allocation4], %s832
          %s834 = sand.u32 %s142, 1
          %s835 = smul.addr %s834, 256
          %s836 = scalar_lea.vmem [#allocation8], %s835
          %838 = dma.done %s833, 4096
        $region64: #{tpu_custom_call.1} parent=59 // pred_fallthru
          _
      $region60: #{tpu_custom_call.1} parent=5 // pred_fallthru
        _
    $region6: #{tpu_custom_call.1} parent=1 // loop_footer
      %s22 = sadd.s32 1, %s18
    $region7: #{tpu_custom_call.1} parent=1 // loop_footer_branch
      %17 = sbr.rel target = $region3
    $region8: #{tpu_custom_call.1} parent=1 // loop_exit
      _
    %839 = vsyncpa [#allocation3], 1
    %s840 = scalar_lea.sflag [#allocation3], 1
    %841 = vsyncpa %s840, 1
    %842 = vsyncpa [#allocation6], 1
    %843 = vsyncpa [#allocation4], 1
    %s844 = scalar_lea.sflag [#allocation4], 1
    %845 = vsyncpa %s844, 1

</llo_original>
